<compile_context>
chip_gen: v6e
topology: v6e:2x2x1
jax: 0.10.0
libtpu: 0.0.40
codegen_flags: <defaults>
</compile_context>

<pallas_src>
import functools

import jax
import jax.numpy as jnp
from jax.experimental import pallas as pl
from jax.experimental.pallas import tpu as pltpu

_LN_EPS = 1e-5  # matches torch.nn.LayerNorm default


def _layer_norm(x, gamma, beta, eps=_LN_EPS):
    mean = jnp.mean(x, axis=-1, keepdims=True)
    var = jnp.mean((x - mean) ** 2, axis=-1, keepdims=True)
    return (x - mean) * jax.lax.rsqrt(var + eps) * gamma + beta


# ----------------------------------------------------------------------------------------------
# Kernel 1: fused q/k/v projection, written directly in the (B, H, L, d_k) attention layout.
# The 1/sqrt(d_k) scale is folded into q here (L*D multiplies instead of L*L later).
# ----------------------------------------------------------------------------------------------
def _qkv_kernel(seq_ref, wqkv_ref, bqkv_ref, q_ref, k_ref, v_ref,
                *, scale, n_heads, d_model, d_k):
    x = seq_ref[0].astype(wqkv_ref.dtype)                                  # [TL, D] compute dtype
    qkv = jnp.dot(x, wqkv_ref[...], preferred_element_type=jnp.float32) + bqkv_ref[...]  # [TL, 3D] f32
    for h in range(n_heads):                                               # static unrolled head split
        lo = h * d_k
        q_ref[0, h] = (qkv[:, lo:lo + d_k] * scale).astype(q_ref.dtype)
        k_ref[0, h] = qkv[:, d_model + lo:d_model + lo + d_k].astype(k_ref.dtype)
        v_ref[0, h] = qkv[:, 2 * d_model + lo:2 * d_model + lo + d_k].astype(v_ref.dtype)


# ----------------------------------------------------------------------------------------------
# Kernel 2: head-batched scaled-dot-product attention for one (batch, q-tile) block.
# q is pre-scaled.  Heads are a leading batch dim (batched einsums, no per-head matmul glue).
# The softmax normalization is applied after the PV matmul (L/d_k less VPU work), and heads are
# merged in-kernel so the output block is a lane-dense (1, TQ, D) store in compute dtype.
# ----------------------------------------------------------------------------------------------
def _attention_kernel(q_ref, k_ref, v_ref, o_ref,
                      *, compute_dtype, exp_dtype, approx_recip, n_heads, d_k):
    q = q_ref[0]                                                           # [H, TQ, dk]
    k = k_ref[0]                                                           # [H, L,  dk]
    v = v_ref[0]                                                           # [H, L,  dk]
    s = jnp.einsum("hqd,hkd->hqk", q, k, preferred_element_type=jnp.float32)
    # softmax is shift-invariant per row, so per-row max matches the reference's global-max
    # subtraction (mask=None path).
    s = s - jnp.max(s, axis=-1, keepdims=True)
    e = jnp.exp(s.astype(exp_dtype))                                       # EUP; bf16 on v6e/v7x
    denom = jnp.sum(e, axis=-1, keepdims=True, dtype=jnp.float32)          # [H, TQ, 1] f32
    ctx = jnp.einsum("hqk,hkd->hqd", e.astype(compute_dtype), v,
                     preferred_element_type=jnp.float32)                   # [H, TQ, dk] f32
    ctx = ctx * pl.reciprocal(denom, approx=approx_recip)                  # normalize after PV
    for h in range(n_heads):                                               # in-kernel head merge
        o_ref[0, :, h * d_k:(h + 1) * d_k] = ctx[h].astype(o_ref.dtype)
    # TODO(synk): mask path (mask==0 -> -inf, all-masked rows -> 0) not implemented (mask=None only);
    # K/V are held whole per q-tile -- stream K/V tiles (online softmax) for very long sequences.


# ----------------------------------------------------------------------------------------------
# Kernel 3: residual + LayerNorm1, position-wise FFN with the hidden dim F either VMEM-resident
# (single chunk) or streamed over an "arbitrary" grid axis (partial products accumulated in VMEM
# scratch), residual + LayerNorm2.  LN1 output is cached once in f32 and compute-dtype scratch.
# ----------------------------------------------------------------------------------------------
def _ln_ffn_kernel(seq_ref, ctx_ref, w1_ref, b1_ref, w2_ref, b2_ref,
                   g1_ref, be1_ref, g2_ref, be2_ref, out_ref,
                   xln_ref, xlnc_ref, acc_ref):
    fi = pl.program_id(2)

    @pl.when(fi == 0)
    def _():
        # dropout is identity (p = 0)
        xln = _layer_norm(ctx_ref[0].astype(jnp.float32) + seq_ref[0].astype(jnp.float32),
                          g1_ref[...], be1_ref[...])
        xln_ref[...] = xln
        xlnc_ref[...] = xln.astype(xlnc_ref.dtype)
        acc_ref[...] = jnp.zeros_like(acc_ref)

    hid = jnp.dot(xlnc_ref[...], w1_ref[...], preferred_element_type=jnp.float32) + b1_ref[...]
    hid = jnp.maximum(hid, 0.0)
    acc_ref[...] += jnp.dot(hid.astype(xlnc_ref.dtype), w2_ref[...],
                            preferred_element_type=jnp.float32)

    @pl.when(fi == pl.num_programs(2) - 1)
    def _():
        ff = acc_ref[...] + b2_ref[...]
        out_ref[0] = _layer_norm(ff + xln_ref[...], g2_ref[...], be2_ref[...]).astype(out_ref.dtype)


# ----------------------------------------------------------------------------------------------
# Wrapper
# ----------------------------------------------------------------------------------------------
def _pick_tile(total, want):
    """Largest divisor of `total` that is <= `want` and a multiple of 8 (or the full dim)."""
    want = min(want, total)
    if want == total:
        return total
    for t in range(want, 0, -1):
        if total % t == 0 and t % 8 == 0:
            return t
    return total


def _pick_f_chunk(total, want):
    """Largest divisor of F that is <= `want` and a multiple of 128 (lane rule), else F."""
    want = min(want, total)
    if want == total:
        return total
    for c in range(want, 0, -1):
        if total % c == 0 and c % 128 == 0:
            return c
    return total


def _vmem_limit_bytes():
    cap = 64 * 1024 * 1024
    try:
        cap = int(pltpu.get_tpu_info().vmem_capacity_bytes)
    except Exception:  # info query only; never masks kernel errors
        pass
    # leave headroom below physical (v7x has only 64 MiB per TC)
    return min(int(cap * 3 // 4), 100 * 1024 * 1024)


def _const_spec(shape):
    """Constant-index weight/bias/LN-param block: single resident VMEM buffer (no double buffering)."""
    nd = len(shape)
    return pl.BlockSpec(shape, lambda *_, nd=nd: (0,) * nd,
                        pipeline_mode=pl.Buffered(buffer_count=1))


def transformer_layer(seq, params, n_heads, *, compute_dtype=jnp.bfloat16,
                      l_tile=512, q_tile=512, f_chunk=2048, fast_exp=None):
    """Forward pass of TransformerLayer (mask=None, dropout=0, kq_same=False)."""
    B, L, D = seq.shape
    F = params["w1"].shape[1]
    d_k = D // n_heads

    TL = _pick_tile(L, l_tile)
    TQ = _pick_tile(L, q_tile)
    n_l, n_q = L // TL, L // TQ

    vmem_limit = _vmem_limit_bytes()
    cbytes = jnp.dtype(compute_dtype).itemsize
    is_f32 = jnp.dtype(compute_dtype) == jnp.dtype(jnp.float32)
    approx_recip = not is_f32
    if fast_exp is None:
        fast_exp = not is_f32
    # TODO(synk): on v5e keep fast_exp=False (no bf16 EUP/VPU path); auto-detect generation if needed.
    exp_dtype = compute_dtype if (fast_exp and not is_f32) else jnp.float32

    # Cast matmul weights to the MXU compute dtype; biases / LN params stay f32 (applied on the
    # f32 accumulator / VPU side).  QKV weights fused into one (D, 3D) matmul operand.
    wqkv = jnp.concatenate([params["wq"], params["wk"], params["wv"]], axis=1).astype(compute_dtype)
    bqkv = jnp.concatenate([params["bq"], params["bk"], params["bv"]], axis=1)  # (1, 3D) f32
    w1 = params["w1"].astype(compute_dtype)
    w2 = params["w2"].astype(compute_dtype)

    # ---------------- kernel 1: fused q/k/v projection -> (B, H, L, d_k) ----------------
    qkv_call = pl.pallas_call(
        functools.partial(_qkv_kernel, scale=1.0 / (d_k ** 0.5),
                          n_heads=n_heads, d_model=D, d_k=d_k),
        out_shape=[jax.ShapeDtypeStruct((B, n_heads, L, d_k), compute_dtype)] * 3,
        grid_spec=pltpu.PrefetchScalarGridSpec(
            num_scalar_prefetch=0,
            grid=(B, n_l),
            in_specs=[
                pl.BlockSpec((1, TL, D), lambda b, t: (b, t, 0)),   # seq tile
                _const_spec((D, 3 * D)),                            # wq|wk|wv fused
                _const_spec((1, 3 * D)),                            # bq|bk|bv fused
            ],
            out_specs=[pl.BlockSpec((1, n_heads, TL, d_k), lambda b, t: (b, 0, t, 0))] * 3,
        ),
        compiler_params=pltpu.CompilerParams(
            dimension_semantics=("parallel", "parallel"),
            vmem_limit_bytes=vmem_limit),
        cost_estimate=pl.CostEstimate(
            flops=6 * B * L * D * D,
            transcendentals=0,
            bytes_accessed=int(B * L * D * 4 + 3 * D * D * cbytes + 3 * B * L * D * cbytes)),
    )
    q4, k4, v4 = qkv_call(seq, wqkv, bqkv)

    # ---------------- kernel 2: attention (heads merged in-kernel) ----------------
    kv_spec = pl.BlockSpec((1, n_heads, L, d_k), lambda b, i: (b, 0, 0, 0),
                           pipeline_mode=pl.Buffered(buffer_count=1))
    attn_call = pl.pallas_call(
        functools.partial(_attention_kernel, compute_dtype=compute_dtype,
                          exp_dtype=exp_dtype, approx_recip=approx_recip,
                          n_heads=n_heads, d_k=d_k),
        out_shape=jax.ShapeDtypeStruct((B, L, D), compute_dtype),
        grid_spec=pltpu.PrefetchScalarGridSpec(
            num_scalar_prefetch=0,
            grid=(B, n_q),
            in_specs=[
                pl.BlockSpec((1, n_heads, TQ, d_k), lambda b, i: (b, 0, i, 0)),  # q tile
                kv_spec,                                                          # k (full, single-buffered)
                kv_spec,                                                          # v (full, single-buffered)
            ],
            out_specs=pl.BlockSpec((1, TQ, D), lambda b, i: (b, i, 0)),           # lane-dense merged ctx
        ),
        compiler_params=pltpu.CompilerParams(
            dimension_semantics=("parallel", "parallel"),
            vmem_limit_bytes=vmem_limit),
        cost_estimate=pl.CostEstimate(
            flops=4 * B * L * L * D,
            transcendentals=B * n_heads * L * L,
            bytes_accessed=int(4 * B * L * D * cbytes)),
    )
    ctx = attn_call(q4, k4, v4)

    # ---------------- kernel 3: LN1 + FFN (resident or F-chunked) + LN2 ----------------
    ffn_weight_bytes = 2 * D * F * cbytes + (F + D) * 4
    if ffn_weight_bytes <= vmem_limit // 3:
        FC = F                                                   # weights fully VMEM-resident
    else:
        FC = _pick_f_chunk(F, f_chunk)
    n_f = F // FC

    if n_f == 1:
        w1_spec, b1_spec, w2_spec = _const_spec((D, FC)), _const_spec((1, FC)), _const_spec((FC, D))
    else:
        w1_spec = pl.BlockSpec((D, FC), lambda b, t, f: (0, f))
        b1_spec = pl.BlockSpec((1, FC), lambda b, t, f: (0, f))
        w2_spec = pl.BlockSpec((FC, D), lambda b, t, f: (f, 0))

    ffn_call = pl.pallas_call(
        _ln_ffn_kernel,
        out_shape=jax.ShapeDtypeStruct((B, L, D), seq.dtype),
        grid_spec=pltpu.PrefetchScalarGridSpec(
            num_scalar_prefetch=0,
            grid=(B, n_l, n_f),
            in_specs=[
                pl.BlockSpec((1, TL, D), lambda b, t, f: (b, t, 0)),   # seq (residual)
                pl.BlockSpec((1, TL, D), lambda b, t, f: (b, t, 0)),   # attention context (compute dtype)
                w1_spec, b1_spec, w2_spec,                              # FFN weight (chunks)
                _const_spec((1, D)),                                    # b2
                _const_spec((1, D)), _const_spec((1, D)),               # ln1 gamma/beta
                _const_spec((1, D)), _const_spec((1, D)),               # ln2 gamma/beta
            ],
            out_specs=pl.BlockSpec((1, TL, D), lambda b, t, f: (b, t, 0)),
            scratch_shapes=[pltpu.VMEM((TL, D), jnp.float32),       # LN1 output (f32, reused by LN2 residual)
                            pltpu.VMEM((TL, D), compute_dtype),     # LN1 output in compute dtype (matmul input)
                            pltpu.VMEM((TL, D), jnp.float32)],      # FFN accumulator
        ),
        compiler_params=pltpu.CompilerParams(
            dimension_semantics=("parallel", "parallel", "arbitrary"),
            vmem_limit_bytes=vmem_limit),
        cost_estimate=pl.CostEstimate(
            flops=4 * B * L * D * F,
            transcendentals=0,
            bytes_accessed=int(2 * B * L * D * 4 + B * L * D * cbytes + 2 * D * F * cbytes)),
    )
    return ffn_call(seq, ctx, w1, params["b1"], w2, params["b2"],
                    params["g1"], params["be1"], params["g2"], params["be2"])


def transformer_layer_ref(seq, params, n_heads):
    """Pure-JAX reference replicating the PyTorch forward (mask=None, dropout=0)."""
    B, L, D = seq.shape
    d_k = D // n_heads
    q = seq @ params["wq"] + params["bq"]
    k = seq @ params["wk"] + params["bk"]
    v = seq @ params["wv"] + params["bv"]

    def split(x):  # [B, L, D] -> [B, H, L, d_k]
        return x.reshape(B, L, n_heads, d_k).transpose(0, 2, 1, 3)

    qh, kh, vh = split(q), split(k), split(v)
    scores = jnp.einsum("bhld,bhmd->bhlm", qh, kh) / (d_k ** 0.5)
    scores = jax.nn.softmax(scores - jnp.max(scores), axis=-1)
    ctx = jnp.einsum("bhlm,bhmd->bhld", scores, vh)
    ctx = ctx.transpose(0, 2, 1, 3).reshape(B, L, D)
    ctx = _layer_norm(ctx + seq, params["g1"], params["be1"])
    hid = jnp.maximum(ctx @ params["w1"] + params["b1"], 0.0)
    ff = hid @ params["w2"] + params["b2"]
    return _layer_norm(ff + ctx, params["g2"], params["be2"])


if __name__ == "__main__":
    B, L, D, F, H = 2, 8, 32, 64, 4
    key = jax.random.PRNGKey(0)
    ks = jax.random.split(key, 12)
    s = 0.1
    params = dict(
        wq=jax.random.normal(ks[0], (D, D), jnp.float32) * s,
        bq=jax.random.normal(ks[1], (1, D), jnp.float32) * s,
        wk=jax.random.normal(ks[2], (D, D), jnp.float32) * s,
        bk=jax.random.normal(ks[3], (1, D), jnp.float32) * s,
        wv=jax.random.normal(ks[4], (D, D), jnp.float32) * s,
        bv=jax.random.normal(ks[5], (1, D), jnp.float32) * s,
        w1=jax.random.normal(ks[6], (D, F), jnp.float32) * s,
        b1=jax.random.normal(ks[7], (1, F), jnp.float32) * s,
        w2=jax.random.normal(ks[8], (F, D), jnp.float32) * s,
        b2=jax.random.normal(ks[9], (1, D), jnp.float32) * s,
        g1=jnp.ones((1, D), jnp.float32),
        be1=jnp.zeros((1, D), jnp.float32),
        g2=jnp.ones((1, D), jnp.float32),
        be2=jnp.zeros((1, D), jnp.float32),
    )
    seq = jax.random.normal(ks[10], (B, L, D), jnp.float32)

    ref = transformer_layer_ref(seq, params, H)

    # 1) f32 compute path: tight check of the math against the pure-JAX reference.
    out_f32 = transformer_layer(seq, params, H, compute_dtype=jnp.float32)
    jax.block_until_ready(out_f32)
    assert out_f32.shape == (B, L, D)
    err32 = float(jnp.max(jnp.abs(out_f32 - ref)))
    assert jnp.allclose(out_f32, ref, atol=1e-3, rtol=1e-3), err32

    # 2) bf16 MXU path (the performance configuration): looser tolerance.
    out_bf16 = transformer_layer(seq, params, H, compute_dtype=jnp.bfloat16)
    jax.block_until_ready(out_bf16)
    err16 = float(jnp.max(jnp.abs(out_bf16.astype(jnp.float32) - ref)))
    assert jnp.allclose(out_bf16.astype(jnp.float32), ref, atol=5e-2, rtol=5e-2), err16

    print("KERNEL_OK")
</pallas_src>

<mosaic_0001>
module attributes {stable_mosaic.version = 11 : i64} {
  func.func @_qkv_kernel(%arg0: i32, %arg1: i32, %arg2: memref<1x8x32xf32, #tpu.memory_space<vmem>>, %arg3: memref<32x96xf32, #tpu.memory_space<vmem>>, %arg4: memref<1x96xf32, #tpu.memory_space<vmem>>, %arg5: memref<1x4x8x8xf32, #tpu.memory_space<vmem>>, %arg6: memref<1x4x8x8xf32, #tpu.memory_space<vmem>>, %arg7: memref<1x4x8x8xf32, #tpu.memory_space<vmem>>) attributes {dimension_semantics = [#tpu.dimension_semantics<parallel>, #tpu.dimension_semantics<parallel>], iteration_bounds = array<i64: 2, 1>, scalar_prefetch = 0 : i64, scratch_operands = 0 : i64, tpu.core_type = #tpu.core_type<tc>, window_params = [{transform_indices = @transform_0, window_bounds = array<i64: 1, 8, 32>}, {pipeline_mode = #tpu.pipeline_mode<synchronous>, transform_indices = @transform_1, window_bounds = array<i64: 32, 96>}, {pipeline_mode = #tpu.pipeline_mode<synchronous>, transform_indices = @transform_2, window_bounds = array<i64: 1, 96>}, {transform_indices = @transform_3, window_bounds = array<i64: 1, 4, 8, 8>}, {transform_indices = @transform_4, window_bounds = array<i64: 1, 4, 8, 8>}, {transform_indices = @transform_5, window_bounds = array<i64: 1, 4, 8, 8>}]} {
    %c0 = arith.constant 0 : index
    %c0_0 = arith.constant 0 : index
    %c0_1 = arith.constant 0 : index
    %0 = vector.load %arg2[%c0, %c0_0, %c0_1] : memref<1x8x32xf32, #tpu.memory_space<vmem>>, vector<1x8x32xf32>
    %1 = vector.shape_cast %0 : vector<1x8x32xf32> to vector<8x32xf32>
    %c0_2 = arith.constant 0 : index
    %c0_3 = arith.constant 0 : index
    %2 = vector.load %arg3[%c0_2, %c0_3] : memref<32x96xf32, #tpu.memory_space<vmem>>, vector<32x96xf32>
    %cst = arith.constant dense<0.000000e+00> : vector<8x96xf32>
    %3 = tpu.matmul %1, %2, %cst {dimension_numbers = #tpu.dot_dimension_numbers<[1], [0], [0], [1], [0, 0, 1, 1], [], []>} : vector<8x32xf32>, vector<32x96xf32>, vector<8x96xf32> -> vector<8x96xf32>
    %c0_4 = arith.constant 0 : index
    %c0_5 = arith.constant 0 : index
    %4 = vector.load %arg4[%c0_4, %c0_5] : memref<1x96xf32, #tpu.memory_space<vmem>>, vector<1x96xf32>
    %5 = vector.broadcast %4 : vector<1x96xf32> to vector<8x96xf32>
    %6 = arith.addf %3, %5 : vector<8x96xf32>
    %7 = vector.extract_strided_slice %6 {offsets = [0, 0], sizes = [8, 8], strides = [1, 1]} : vector<8x96xf32> to vector<8x8xf32>
    %cst_6 = arith.constant 0.353553385 : f32
    %8 = vector.broadcast %cst_6 : f32 to vector<8x8xf32>
    %9 = arith.mulf %7, %8 : vector<8x8xf32>
    %c0_7 = arith.constant 0 : index
    %c0_8 = arith.constant 0 : index
    %c0_9 = arith.constant 0 : index
    %c0_10 = arith.constant 0 : index
    %10 = vector.load %arg5[%c0_7, %c0_8, %c0_9, %c0_10] : memref<1x4x8x8xf32, #tpu.memory_space<vmem>>, vector<1x1x8x8xf32>
    %11 = vector.shape_cast %10 : vector<1x1x8x8xf32> to vector<8x8xf32>
    %12 = vector.shape_cast %9 : vector<8x8xf32> to vector<1x1x8x8xf32>
    tpu.vector_store %arg5[%c0_7, %c0_8, %c0_9, %c0_10], %12 {strides = array<i32>} : memref<1x4x8x8xf32, #tpu.memory_space<vmem>>, vector<1x1x8x8xf32>,
    %13 = vector.extract_strided_slice %6 {offsets = [0, 32], sizes = [8, 8], strides = [1, 1]} : vector<8x96xf32> to vector<8x8xf32>
    %c0_11 = arith.constant 0 : index
    %c0_12 = arith.constant 0 : index
    %c0_13 = arith.constant 0 : index
    %c0_14 = arith.constant 0 : index
    %14 = vector.load %arg6[%c0_11, %c0_12, %c0_13, %c0_14] : memref<1x4x8x8xf32, #tpu.memory_space<vmem>>, vector<1x1x8x8xf32>
    %15 = vector.shape_cast %14 : vector<1x1x8x8xf32> to vector<8x8xf32>
    %16 = vector.shape_cast %13 : vector<8x8xf32> to vector<1x1x8x8xf32>
    tpu.vector_store %arg6[%c0_11, %c0_12, %c0_13, %c0_14], %16 {strides = array<i32>} : memref<1x4x8x8xf32, #tpu.memory_space<vmem>>, vector<1x1x8x8xf32>,
    %17 = vector.extract_strided_slice %6 {offsets = [0, 64], sizes = [8, 8], strides = [1, 1]} : vector<8x96xf32> to vector<8x8xf32>
    %c0_15 = arith.constant 0 : index
    %c0_16 = arith.constant 0 : index
    %c0_17 = arith.constant 0 : index
    %c0_18 = arith.constant 0 : index
    %18 = vector.load %arg7[%c0_15, %c0_16, %c0_17, %c0_18] : memref<1x4x8x8xf32, #tpu.memory_space<vmem>>, vector<1x1x8x8xf32>
    %19 = vector.shape_cast %18 : vector<1x1x8x8xf32> to vector<8x8xf32>
    %20 = vector.shape_cast %17 : vector<8x8xf32> to vector<1x1x8x8xf32>
    tpu.vector_store %arg7[%c0_15, %c0_16, %c0_17, %c0_18], %20 {strides = array<i32>} : memref<1x4x8x8xf32, #tpu.memory_space<vmem>>, vector<1x1x8x8xf32>,
    %21 = vector.extract_strided_slice %6 {offsets = [0, 8], sizes = [8, 8], strides = [1, 1]} : vector<8x96xf32> to vector<8x8xf32>
    %cst_19 = arith.constant 0.353553385 : f32
    %22 = vector.broadcast %cst_19 : f32 to vector<8x8xf32>
    %23 = arith.mulf %21, %22 : vector<8x8xf32>
    %c0_20 = arith.constant 0 : index
    %c1 = arith.constant 1 : index
    %c0_21 = arith.constant 0 : index
    %c0_22 = arith.constant 0 : index
    %24 = vector.load %arg5[%c0_20, %c1, %c0_21, %c0_22] : memref<1x4x8x8xf32, #tpu.memory_space<vmem>>, vector<1x1x8x8xf32>
    %25 = vector.shape_cast %24 : vector<1x1x8x8xf32> to vector<8x8xf32>
    %26 = vector.shape_cast %23 : vector<8x8xf32> to vector<1x1x8x8xf32>
    tpu.vector_store %arg5[%c0_20, %c1, %c0_21, %c0_22], %26 {strides = array<i32>} : memref<1x4x8x8xf32, #tpu.memory_space<vmem>>, vector<1x1x8x8xf32>,
    %27 = vector.extract_strided_slice %6 {offsets = [0, 40], sizes = [8, 8], strides = [1, 1]} : vector<8x96xf32> to vector<8x8xf32>
    %c0_23 = arith.constant 0 : index
    %c1_24 = arith.constant 1 : index
    %c0_25 = arith.constant 0 : index
    %c0_26 = arith.constant 0 : index
    %28 = vector.load %arg6[%c0_23, %c1_24, %c0_25, %c0_26] : memref<1x4x8x8xf32, #tpu.memory_space<vmem>>, vector<1x1x8x8xf32>
    %29 = vector.shape_cast %28 : vector<1x1x8x8xf32> to vector<8x8xf32>
    %30 = vector.shape_cast %27 : vector<8x8xf32> to vector<1x1x8x8xf32>
    tpu.vector_store %arg6[%c0_23, %c1_24, %c0_25, %c0_26], %30 {strides = array<i32>} : memref<1x4x8x8xf32, #tpu.memory_space<vmem>>, vector<1x1x8x8xf32>,
    %31 = vector.extract_strided_slice %6 {offsets = [0, 72], sizes = [8, 8], strides = [1, 1]} : vector<8x96xf32> to vector<8x8xf32>
    %c0_27 = arith.constant 0 : index
    %c1_28 = arith.constant 1 : index
    %c0_29 = arith.constant 0 : index
    %c0_30 = arith.constant 0 : index
    %32 = vector.load %arg7[%c0_27, %c1_28, %c0_29, %c0_30] : memref<1x4x8x8xf32, #tpu.memory_space<vmem>>, vector<1x1x8x8xf32>
    %33 = vector.shape_cast %32 : vector<1x1x8x8xf32> to vector<8x8xf32>
    %34 = vector.shape_cast %31 : vector<8x8xf32> to vector<1x1x8x8xf32>
    tpu.vector_store %arg7[%c0_27, %c1_28, %c0_29, %c0_30], %34 {strides = array<i32>} : memref<1x4x8x8xf32, #tpu.memory_space<vmem>>, vector<1x1x8x8xf32>,
    %35 = vector.extract_strided_slice %6 {offsets = [0, 16], sizes = [8, 8], strides = [1, 1]} : vector<8x96xf32> to vector<8x8xf32>
    %cst_31 = arith.constant 0.353553385 : f32
    %36 = vector.broadcast %cst_31 : f32 to vector<8x8xf32>
    %37 = arith.mulf %35, %36 : vector<8x8xf32>
    %c0_32 = arith.constant 0 : index
    %c2 = arith.constant 2 : index
    %c0_33 = arith.constant 0 : index
    %c0_34 = arith.constant 0 : index
    %38 = vector.load %arg5[%c0_32, %c2, %c0_33, %c0_34] : memref<1x4x8x8xf32, #tpu.memory_space<vmem>>, vector<1x1x8x8xf32>
    %39 = vector.shape_cast %38 : vector<1x1x8x8xf32> to vector<8x8xf32>
    %40 = vector.shape_cast %37 : vector<8x8xf32> to vector<1x1x8x8xf32>
    tpu.vector_store %arg5[%c0_32, %c2, %c0_33, %c0_34], %40 {strides = array<i32>} : memref<1x4x8x8xf32, #tpu.memory_space<vmem>>, vector<1x1x8x8xf32>,
    %41 = vector.extract_strided_slice %6 {offsets = [0, 48], sizes = [8, 8], strides = [1, 1]} : vector<8x96xf32> to vector<8x8xf32>
    %c0_35 = arith.constant 0 : index
    %c2_36 = arith.constant 2 : index
    %c0_37 = arith.constant 0 : index
    %c0_38 = arith.constant 0 : index
    %42 = vector.load %arg6[%c0_35, %c2_36, %c0_37, %c0_38] : memref<1x4x8x8xf32, #tpu.memory_space<vmem>>, vector<1x1x8x8xf32>
    %43 = vector.shape_cast %42 : vector<1x1x8x8xf32> to vector<8x8xf32>
    %44 = vector.shape_cast %41 : vector<8x8xf32> to vector<1x1x8x8xf32>
    tpu.vector_store %arg6[%c0_35, %c2_36, %c0_37, %c0_38], %44 {strides = array<i32>} : memref<1x4x8x8xf32, #tpu.memory_space<vmem>>, vector<1x1x8x8xf32>,
    %45 = vector.extract_strided_slice %6 {offsets = [0, 80], sizes = [8, 8], strides = [1, 1]} : vector<8x96xf32> to vector<8x8xf32>
    %c0_39 = arith.constant 0 : index
    %c2_40 = arith.constant 2 : index
    %c0_41 = arith.constant 0 : index
    %c0_42 = arith.constant 0 : index
    %46 = vector.load %arg7[%c0_39, %c2_40, %c0_41, %c0_42] : memref<1x4x8x8xf32, #tpu.memory_space<vmem>>, vector<1x1x8x8xf32>
    %47 = vector.shape_cast %46 : vector<1x1x8x8xf32> to vector<8x8xf32>
    %48 = vector.shape_cast %45 : vector<8x8xf32> to vector<1x1x8x8xf32>
    tpu.vector_store %arg7[%c0_39, %c2_40, %c0_41, %c0_42], %48 {strides = array<i32>} : memref<1x4x8x8xf32, #tpu.memory_space<vmem>>, vector<1x1x8x8xf32>,
    %49 = vector.extract_strided_slice %6 {offsets = [0, 24], sizes = [8, 8], strides = [1, 1]} : vector<8x96xf32> to vector<8x8xf32>
    %cst_43 = arith.constant 0.353553385 : f32
    %50 = vector.broadcast %cst_43 : f32 to vector<8x8xf32>
    %51 = arith.mulf %49, %50 : vector<8x8xf32>
    %c0_44 = arith.constant 0 : index
    %c3 = arith.constant 3 : index
    %c0_45 = arith.constant 0 : index
    %c0_46 = arith.constant 0 : index
    %52 = vector.load %arg5[%c0_44, %c3, %c0_45, %c0_46] : memref<1x4x8x8xf32, #tpu.memory_space<vmem>>, vector<1x1x8x8xf32>
    %53 = vector.shape_cast %52 : vector<1x1x8x8xf32> to vector<8x8xf32>
    %54 = vector.shape_cast %51 : vector<8x8xf32> to vector<1x1x8x8xf32>
    tpu.vector_store %arg5[%c0_44, %c3, %c0_45, %c0_46], %54 {strides = array<i32>} : memref<1x4x8x8xf32, #tpu.memory_space<vmem>>, vector<1x1x8x8xf32>,
    %55 = vector.extract_strided_slice %6 {offsets = [0, 56], sizes = [8, 8], strides = [1, 1]} : vector<8x96xf32> to vector<8x8xf32>
    %c0_47 = arith.constant 0 : index
    %c3_48 = arith.constant 3 : index
    %c0_49 = arith.constant 0 : index
    %c0_50 = arith.constant 0 : index
    %56 = vector.load %arg6[%c0_47, %c3_48, %c0_49, %c0_50] : memref<1x4x8x8xf32, #tpu.memory_space<vmem>>, vector<1x1x8x8xf32>
    %57 = vector.shape_cast %56 : vector<1x1x8x8xf32> to vector<8x8xf32>
    %58 = vector.shape_cast %55 : vector<8x8xf32> to vector<1x1x8x8xf32>
    tpu.vector_store %arg6[%c0_47, %c3_48, %c0_49, %c0_50], %58 {strides = array<i32>} : memref<1x4x8x8xf32, #tpu.memory_space<vmem>>, vector<1x1x8x8xf32>,
    %59 = vector.extract_strided_slice %6 {offsets = [0, 88], sizes = [8, 8], strides = [1, 1]} : vector<8x96xf32> to vector<8x8xf32>
    %c0_51 = arith.constant 0 : index
    %c3_52 = arith.constant 3 : index
    %c0_53 = arith.constant 0 : index
    %c0_54 = arith.constant 0 : index
    %60 = vector.load %arg7[%c0_51, %c3_52, %c0_53, %c0_54] : memref<1x4x8x8xf32, #tpu.memory_space<vmem>>, vector<1x1x8x8xf32>
    %61 = vector.shape_cast %60 : vector<1x1x8x8xf32> to vector<8x8xf32>
    %62 = vector.shape_cast %59 : vector<8x8xf32> to vector<1x1x8x8xf32>
    tpu.vector_store %arg7[%c0_51, %c3_52, %c0_53, %c0_54], %62 {strides = array<i32>} : memref<1x4x8x8xf32, #tpu.memory_space<vmem>>, vector<1x1x8x8xf32>,
    return
  }
  func.func @transform_0(%arg0: i32, %arg1: i32) -> (i32, i32, i32) {
    %c0_i32 = arith.constant 0 : i32
    %c0_i32_0 = arith.constant 0 : i32
    return %arg0, %arg1, %c0_i32 : i32, i32, i32
  }
  func.func @transform_1(%arg0: i32, %arg1: i32) -> (i32, i32) {
    %c0_i32 = arith.constant 0 : i32
    %c0_i32_0 = arith.constant 0 : i32
    %c0_i32_1 = arith.constant 0 : i32
    return %c0_i32, %c0_i32_0 : i32, i32
  }
  func.func @transform_2(%arg0: i32, %arg1: i32) -> (i32, i32) {
    %c0_i32 = arith.constant 0 : i32
    %c0_i32_0 = arith.constant 0 : i32
    %c0_i32_1 = arith.constant 0 : i32
    return %c0_i32, %c0_i32_0 : i32, i32
  }
  func.func @transform_3(%arg0: i32, %arg1: i32) -> (i32, i32, i32, i32) {
    %c0_i32 = arith.constant 0 : i32
    %c0_i32_0 = arith.constant 0 : i32
    %c0_i32_1 = arith.constant 0 : i32
    return %arg0, %c0_i32, %arg1, %c0_i32_0 : i32, i32, i32, i32
  }
  func.func @transform_4(%arg0: i32, %arg1: i32) -> (i32, i32, i32, i32) {
    %c0_i32 = arith.constant 0 : i32
    %c0_i32_0 = arith.constant 0 : i32
    %c0_i32_1 = arith.constant 0 : i32
    return %arg0, %c0_i32, %arg1, %c0_i32_0 : i32, i32, i32, i32
  }
  func.func @transform_5(%arg0: i32, %arg1: i32) -> (i32, i32, i32, i32) {
    %c0_i32 = arith.constant 0 : i32
    %c0_i32_0 = arith.constant 0 : i32
    %c0_i32_1 = arith.constant 0 : i32
    return %arg0, %c0_i32, %arg1, %c0_i32_0 : i32, i32, i32, i32
  }
}

</mosaic_0001>

<llo_original>
// kernel: tpu_custom_call.1
$region0: #{tpu_custom_call.1}
  #allocation0 [shape = 'u32[]', space=smem, size = 0x4, offset = 0x4, fixed_abs, tag = 'smem constant byte address 0x4 - core index']
  #allocation1 [shape = 'u32[144,128]{1,0:T(1,128)}', space=vmem, size = 0x12000, scoped, tag = 'internal scratch']
  %s0 = inlined_call_operand.hbm [shape: f32[2,8,32], index: 0, kind: input, shape index: {}]
  %s1 = inlined_call_operand.hbm [shape: f32[32,96], index: 1, kind: input, shape index: {}]
  %s2 = inlined_call_operand.vmem [shape: f32[1,96], index: 2, kind: input, shape index: {}]
  %s3 = inlined_call_operand.hbm [shape: f32[2,4,8,8], index: 3, kind: output, shape index: {0}]
  %s4 = inlined_call_operand.hbm [shape: f32[2,4,8,8], index: 4, kind: output, shape index: {1}]
  %s5 = inlined_call_operand.hbm [shape: f32[2,4,8,8], index: 5, kind: output, shape index: {2}]
  %6 = xla_tuple %s3, %s4, %s5
  %s7 = sld [smem:[#allocation0]]
  $region69: #{tpu_custom_call.1} parent=0
    _
  %s9 = ssub.s32 1, %s7
  %s10 = scalar_select 0, %s9, %s7
  $region1: #{tpu_custom_call.1} parent=0
    #allocation2 [shape = 'u8[8192]{0}', space=vmem, size = 0x2000, scoped, tag = 'input window, operand 0']
    #allocation3 [shape = 's32[2]{0}', space=sflag, size = 0x8, scoped, tag = 'scoped memory for tpu_custom_call.1']
    #allocation4 [shape = 's32[2]{0}', space=sflag, size = 0x8, scoped, tag = 'scoped memory for tpu_custom_call.1']
    #allocation5 [shape = 'u8[16384]{0}', space=vmem, size = 0x4000, scoped, tag = 'input window, operand 1, single buffered']
    #allocation6 [shape = 's32[1]{0}', space=sflag, size = 0x4, scoped, tag = 'scoped memory for tpu_custom_call.1']
    #allocation7 [shape = 'u8[32768]{0}', space=vmem, size = 0x8000, scoped, tag = 'output window, operand 0']
    #allocation8 [shape = 'u8[32768]{0}', space=vmem, size = 0x8000, scoped, tag = 'output window, operand 1']
    #allocation9 [shape = 's32[2]{0}', space=sflag, size = 0x8, scoped, tag = 'scoped memory for tpu_custom_call.1']
    #allocation10 [shape = 'u8[32768]{0}', space=vmem, size = 0x8000, scoped, tag = 'output window, operand 2']
    %11 = vsyncpa [#allocation3], 0
    %s12 = scalar_lea.sflag [#allocation3], 1
    %13 = vsyncpa %s12, 0
    %14 = vsyncpa [#allocation6], 0
    %15 = vsyncpa [#allocation4], 0
    %s16 = scalar_lea.sflag [#allocation4], 1
    %17 = vsyncpa %s16, 0
    %18 = vsyncpa [#allocation9], 0
    %s19 = scalar_lea.sflag [#allocation9], 1
    %20 = vsyncpa %s19, 0
    loop: start=0, step=1, limit=4
    $region2: #{tpu_custom_call.1} parent=1 // loop_pre_header
      _
    $region3: #{tpu_custom_call.1} parent=1 // loop_header
      %s22 = sphi 0, %s26
      %p23 = scmp.ge.s32.totalorder %s22, 4
      %s29 = sphi 0, %s41
      %s30 = sphi 0, %s37
      %s31 = sphi 0, %s29
      %s32 = sphi 0, %s30
      %s33 = sphi 0, %s31
      %s34 = sphi 0, %s32
      %s46 = sphi 0, %s48
      %s49 = sphi 0, %s46
      %s50 = sphi 0, %s49
      %s66 = sphi 0, %s50
      %s70 = sphi 0, %s70
      %s72 = sphi 0, %s70
      %s73 = sphi 0, %s72
      %s87 = sphi 0, %s73
      %s91 = sphi 0, %s91
      %s93 = sphi 0, %s91
      %s94 = sphi 0, %s93
      %s108 = sphi 0, %s94
      %s116 = sphi 0, %s118
      %s119 = sphi 0, %s116
      %s120 = sphi 0, %s119
      %s136 = sphi 0, %s120
      %s144 = sphi 0, %s146
      %s147 = sphi 0, %s144
      %s148 = sphi 0, %s147
      %s164 = sphi 0, %s148
      %s172 = sphi 0, %s174
      %s175 = sphi 0, %s172
      %s176 = sphi 0, %s175
      %s192 = sphi 0, %s176
    $region4: #{tpu_custom_call.1} parent=1 // loop_header_branch
      %25 = sbr.rel (%p23) target = $region8
    $region5: #{tpu_custom_call.1} parent=1 // loop_body
      %s27 = ssub.s32 %s22, 1
      %s28 = ssub.s32 %s22, 2
      %s35 = sadd.s32 1, %s30
      %p36 = scmp.ge.s32.totalorder %s35, 1
      %s37 = scalar_select %p36, 0, %s35
      %s38 = sadd.s32 1, %s29
      %s39 = scalar_select %p36, %s38, %s29
      %p40 = scmp.ge.s32.totalorder %s39, 2
      %s41 = scalar_select %p40, 0, %s39
      %s42 = ssub.s32 %s29, %s41
      %s43 = ssub.s32 %s30, %s37
      %s44 = sor.u32 %s42, %s43
      %p45 = scmp.eq.s32.totalorder %s44, 0
      %s47 = sadd.s32 %s46, 1
      %s48 = scalar_select %p45, %s46, %s47
      %p51 = pneg %p45
      %p52 = scmp.eq.s32.totalorder %s22, 1
      %p53 = por %p51, %p52
      %p54 = scmp.ne.s32.totalorder %s46, %s49
      %p55 = scmp.eq.s32.totalorder %s22, 0
      %p56 = por %p54, %p55
      %p57 = scmp.ne.s32.totalorder %s46, %s49
      %p58 = scmp.eq.s32.totalorder %s27, 1
      %p59 = por %p57, %p58
      %p60 = scmp.ne.s32.totalorder %s49, %s50
      %p61 = scmp.eq.s32.totalorder %s27, 0
      %p62 = por %p60, %p61
      %p63 = scmp.ne.s32.totalorder %s49, %s50
      %p64 = scmp.eq.s32.totalorder %s28, 1
      %p65 = por %p63, %p64
      %p67 = scmp.ne.s32.totalorder %s50, %s66
      %p68 = scmp.eq.s32.totalorder %s28, 0
      %p69 = por %p67, %p68
      %s71 = sadd.s32 %s70, 1
      %p74 = scmp.eq.s32.totalorder %s22, 1
      %p75 = scmp.ne.s32.totalorder %s70, %s72
      %p76 = scmp.eq.s32.totalorder %s22, 0
      %p77 = por %p75, %p76
      %p78 = scmp.ne.s32.totalorder %s70, %s72
      %p79 = scmp.eq.s32.totalorder %s27, 1
      %p80 = por %p78, %p79
      %p81 = scmp.ne.s32.totalorder %s72, %s73
      %p82 = scmp.eq.s32.totalorder %s27, 0
      %p83 = por %p81, %p82
      %p84 = scmp.ne.s32.totalorder %s72, %s73
      %p85 = scmp.eq.s32.totalorder %s28, 1
      %p86 = por %p84, %p85
      %p88 = scmp.ne.s32.totalorder %s73, %s87
      %p89 = scmp.eq.s32.totalorder %s28, 0
      %p90 = por %p88, %p89
      %s92 = sadd.s32 %s91, 1
      %p95 = scmp.eq.s32.totalorder %s22, 1
      %p96 = scmp.ne.s32.totalorder %s91, %s93
      %p97 = scmp.eq.s32.totalorder %s22, 0
      %p98 = por %p96, %p97
      %p99 = scmp.ne.s32.totalorder %s91, %s93
      %p100 = scmp.eq.s32.totalorder %s27, 1
      %p101 = por %p99, %p100
      %p102 = scmp.ne.s32.totalorder %s93, %s94
      %p103 = scmp.eq.s32.totalorder %s27, 0
      %p104 = por %p102, %p103
      %p105 = scmp.ne.s32.totalorder %s93, %s94
      %p106 = scmp.eq.s32.totalorder %s28, 1
      %p107 = por %p105, %p106
      %p109 = scmp.ne.s32.totalorder %s94, %s108
      %p110 = scmp.eq.s32.totalorder %s28, 0
      %p111 = por %p109, %p110
      %s112 = ssub.s32 %s29, %s41
      %s113 = ssub.s32 %s30, %s37
      %s114 = sor.u32 %s112, %s113
      %p115 = scmp.eq.s32.totalorder %s114, 0
      %s117 = sadd.s32 %s116, 1
      %s118 = scalar_select %p115, %s116, %s117
      %p121 = pneg %p115
      %p122 = scmp.eq.s32.totalorder %s22, 1
      %p123 = por %p121, %p122
      %p124 = scmp.ne.s32.totalorder %s116, %s119
      %p125 = scmp.eq.s32.totalorder %s22, 0
      %p126 = por %p124, %p125
      %p127 = scmp.ne.s32.totalorder %s116, %s119
      %p128 = scmp.eq.s32.totalorder %s27, 1
      %p129 = por %p127, %p128
      %p130 = scmp.ne.s32.totalorder %s119, %s120
      %p131 = scmp.eq.s32.totalorder %s27, 0
      %p132 = por %p130, %p131
      %p133 = scmp.ne.s32.totalorder %s119, %s120
      %p134 = scmp.eq.s32.totalorder %s28, 1
      %p135 = por %p133, %p134
      %p137 = scmp.ne.s32.totalorder %s120, %s136
      %p138 = scmp.eq.s32.totalorder %s28, 0
      %p139 = por %p137, %p138
      %s140 = ssub.s32 %s29, %s41
      %s141 = ssub.s32 %s30, %s37
      %s142 = sor.u32 %s140, %s141
      %p143 = scmp.eq.s32.totalorder %s142, 0
      %s145 = sadd.s32 %s144, 1
      %s146 = scalar_select %p143, %s144, %s145
      %p149 = pneg %p143
      %p150 = scmp.eq.s32.totalorder %s22, 1
      %p151 = por %p149, %p150
      %p152 = scmp.ne.s32.totalorder %s144, %s147
      %p153 = scmp.eq.s32.totalorder %s22, 0
      %p154 = por %p152, %p153
      %p155 = scmp.ne.s32.totalorder %s144, %s147
      %p156 = scmp.eq.s32.totalorder %s27, 1
      %p157 = por %p155, %p156
      %p158 = scmp.ne.s32.totalorder %s147, %s148
      %p159 = scmp.eq.s32.totalorder %s27, 0
      %p160 = por %p158, %p159
      %p161 = scmp.ne.s32.totalorder %s147, %s148
      %p162 = scmp.eq.s32.totalorder %s28, 1
      %p163 = por %p161, %p162
      %p165 = scmp.ne.s32.totalorder %s148, %s164
      %p166 = scmp.eq.s32.totalorder %s28, 0
      %p167 = por %p165, %p166
      %s168 = ssub.s32 %s29, %s41
      %s169 = ssub.s32 %s30, %s37
      %s170 = sor.u32 %s168, %s169
      %p171 = scmp.eq.s32.totalorder %s170, 0
      %s173 = sadd.s32 %s172, 1
      %s174 = scalar_select %p171, %s172, %s173
      %p177 = pneg %p171
      %p178 = scmp.eq.s32.totalorder %s22, 1
      %p179 = por %p177, %p178
      %p180 = scmp.ne.s32.totalorder %s172, %s175
      %p181 = scmp.eq.s32.totalorder %s22, 0
      %p182 = por %p180, %p181
      %p183 = scmp.ne.s32.totalorder %s172, %s175
      %p184 = scmp.eq.s32.totalorder %s27, 1
      %p185 = por %p183, %p184
      %p186 = scmp.ne.s32.totalorder %s175, %s176
      %p187 = scmp.eq.s32.totalorder %s27, 0
      %p188 = por %p186, %p187
      %p189 = scmp.ne.s32.totalorder %s175, %s176
      %p190 = scmp.eq.s32.totalorder %s28, 1
      %p191 = por %p189, %p190
      %p193 = scmp.ne.s32.totalorder %s176, %s192
      %p194 = scmp.eq.s32.totalorder %s28, 0
      %p195 = por %p193, %p194
      %p196 = scmp.le.s32.totalorder 1, %s22
      %p197 = scmp.lt.s32.totalorder %s22, 3
      %p198 = pnand %p196, %p197
      %p199 = pneg %p198
      // Predicated region
      $region9: #{tpu_custom_call.1} parent=5 // pred_check
        _
      $region10: #{tpu_custom_call.1} parent=5 // pred_check_branch
        %201 = sbr.rel (%p198) target = $region12
      $region11: #{tpu_custom_call.1} parent=5 // pred_region
        %s202 = ssub.s32 %s22, 1
        // Predicated region
        $region13: #{tpu_custom_call.1} parent=11 // pred_check
          %p203 = pneg %p83
        $region14: #{tpu_custom_call.1} parent=11 // pred_check_branch
          %205 = sbr.rel (%p203) target = $region16
        $region15: #{tpu_custom_call.1} parent=11 // pred_region
          %s207 = ssub.s32 512, 512
          %208 = vsyncadd [#allocation6], %s207
          %s209 = sshll.u32 [#allocation5], 4
          %s210 = int_to_ptr.vmem [resolvable:$true] %s209
          %215 = dma.hbm_to_vmem [thread:$0]  %s1, 512, %s210, [#allocation6], 128, 128, 8
        $region16: #{tpu_custom_call.1} parent=11 // pred_fallthru
          _
        // Predicated region
        $region17: #{tpu_custom_call.1} parent=11 // pred_check
          %p216 = pneg %p104
        $region18: #{tpu_custom_call.1} parent=11 // pred_check_branch
          %218 = sbr.rel (%p216) target = $region20
        $region19: #{tpu_custom_call.1} parent=11 // pred_region
          _
        $region20: #{tpu_custom_call.1} parent=11 // pred_fallthru
          _
      $region12: #{tpu_custom_call.1} parent=5 // pred_fallthru
        _
      %p219 = scmp.lt.s32.totalorder %s22, 2
      // Predicated region
      $region21: #{tpu_custom_call.1} parent=5 // pred_check
        %p220 = pneg %p219
      $region22: #{tpu_custom_call.1} parent=5 // pred_check_branch
        %222 = sbr.rel (%p220) target = $region24
      $region23: #{tpu_custom_call.1} parent=5 // pred_region
        // Predicated region
        $region25: #{tpu_custom_call.1} parent=23 // pred_check
          %p223 = pneg %p56
        $region26: #{tpu_custom_call.1} parent=23 // pred_check_branch
          %225 = sbr.rel (%p223) target = $region28
        $region27: #{tpu_custom_call.1} parent=23 // pred_region
          %s226 = sand.u32 %s46, 1
          %s227 = scalar_lea.sflag [#allocation3], %s226
          %s228 = sand.u32 %s46, 1
          %s229 = smul.addr %s228, 8
          %s230 = scalar_lea.vmem [#allocation2], %s229
          %s232 = ssub.s32 128, 128
          %233 = vsyncadd %s227, %s232
          %s234 = sadd.s32 %s30, %s29
          %s235 = smul.addr %s234, 128
          %s236 = scalar_lea.hbm %s0, %s235
          %s238 = sshll.u32 %s230, 4
          %s239 = int_to_ptr.vmem [resolvable:$true] %s238
          %241 = dma.hbm_to_vmem [thread:$0]  %s236, 128, %s239, %s227
        $region28: #{tpu_custom_call.1} parent=23 // pred_fallthru
          _
      $region24: #{tpu_custom_call.1} parent=5 // pred_fallthru
        _
      %p242 = scmp.le.s32.totalorder 1, %s22
      %p243 = scmp.lt.s32.totalorder %s22, 3
      %p244 = pnand %p242, %p243
      %p245 = pneg %p244
      // Predicated region
      $region29: #{tpu_custom_call.1} parent=5 // pred_check
        _
      $region30: #{tpu_custom_call.1} parent=5 // pred_check_branch
        %247 = sbr.rel (%p244) target = $region32
      $region31: #{tpu_custom_call.1} parent=5 // pred_region
        %s248 = ssub.s32 %s22, 1
        %s249 = sand.u32 %s49, 1
        %s250 = scalar_lea.sflag [#allocation3], %s249
        %s251 = sand.u32 %s49, 1
        %s252 = smul.addr %s251, 8
        %s253 = scalar_lea.vmem [#allocation2], %s252
        // Predicated region
        $region33: #{tpu_custom_call.1} parent=31 // pred_check
          %p254 = pneg %p62
        $region34: #{tpu_custom_call.1} parent=31 // pred_check_branch
          %256 = sbr.rel (%p254) target = $region36
        $region35: #{tpu_custom_call.1} parent=31 // pred_region
          %257 = dma.done %s250, 128
        $region36: #{tpu_custom_call.1} parent=31 // pred_fallthru
          _
        // Predicated region
        $region37: #{tpu_custom_call.1} parent=31 // pred_check
          %p258 = pneg %p83
        $region38: #{tpu_custom_call.1} parent=31 // pred_check_branch
          %260 = sbr.rel (%p258) target = $region40
        $region39: #{tpu_custom_call.1} parent=31 // pred_region
          %261 = dma.done [#allocation6], 512
        $region40: #{tpu_custom_call.1} parent=31 // pred_fallthru
          _
        %s262 = sand.u32 %s49, 1
        %s263 = scalar_lea.sflag [#allocation3], %s262
        %s264 = sand.u32 %s49, 1
        %s265 = smul.addr %s264, 8
        %s266 = scalar_lea.vmem [#allocation2], %s265
        %p267 = pneg %p62
        %p268 = pneg %p59
        %p269 = pneg %p83
        %p270 = pneg %p80
        %p271 = pneg %p104
        %p272 = pneg %p101
        %p273 = pneg %p132
        %p274 = pneg %p129
        %s275 = sand.u32 %s119, 1
        %s276 = scalar_lea.sflag [#allocation4], %s275
        %s277 = sand.u32 %s119, 1
        %s278 = smul.addr %s277, 32
        %s279 = scalar_lea.vmem [#allocation7], %s278
        %p280 = pneg %p160
        %p281 = pneg %p157
        %s282 = sand.u32 %s27, 1
        %s283 = scalar_lea.sflag [#allocation9], %s282
        %s284 = sand.u32 %s147, 1
        %s285 = smul.addr %s284, 32
        %s286 = scalar_lea.vmem [#allocation8], %s285
        %p287 = pneg %p188
        %p288 = pneg %p185
        %s289 = sand.u32 %s27, 1
        %s290 = scalar_lea.sflag [#allocation9], %s289
        %s291 = sand.u32 %s175, 1
        %s292 = smul.addr %s291, 32
        %s293 = scalar_lea.vmem [#allocation10], %s292
        %v294 = vld [vmem:[%s253] sm:$0xff]
        %v295 = vld [vmem:[#allocation5] sm:$0xff]
        %v296 = vld [vmem:[#allocation5 + $0x8] sm:$0xff]
        %v297 = vld [vmem:[#allocation5 + $0x10] sm:$0xff]
        %v298 = vld [vmem:[#allocation5 + $0x18] sm:$0xff]
        %v299 = vld [vmem:[%s2] sm:$0x1]
        %v301 = vlaneseq
        %v302 = vshrl.u32 %v301, 7
        %v303 = vsub.s32 0, %v302
        %v304 = vrot.slane %v299, %v303
        %vm306 = vcmask 261120
        %v308 = vsel %vm306, %v294, 0
        %310 = vmatprep.subr.mxu0 0.0
        %311 = vmatpush1.msra.mxu0 0.0
        %312 = vmatprep.subr.mxu0 0.0
        %313 = vmatpush1.msra.mxu0 0.0
        %314 = vmatprep.subr.mxu0 0.0
        %315 = vmatpush1.msra.mxu0 0.0
        %316 = vmatprep.subr.mxu0 0.0
        %317 = vmatpush1.msra.mxu0 0.0
        %318 = vmatprep.subr.mxu0 0.0
        %319 = vmatpush1.msra.mxu0 0.0
        %320 = vmatprep.subr.mxu0 0.0
        %321 = vmatpush1.msra.mxu0 0.0
        %322 = vmatprep.subr.mxu0 0.0
        %323 = vmatpush1.msra.mxu0 0.0
        %324 = vmatprep.subr.mxu0 0.0
        %325 = vmatpush1.msra.mxu0 0.0
        %326 = vmatprep.subr.mxu0 0.0
        %327 = vmatpush1.msra.mxu0 0.0
        %328 = vmatprep.subr.mxu0 0.0
        %329 = vmatpush1.msra.mxu0 0.0
        %330 = vmatprep.subr.mxu0 0.0
        %331 = vmatpush1.msra.mxu0 0.0
        %332 = vmatprep.subr.mxu0 0.0
        %333 = vmatpush1.msra.mxu0 0.0
        %334 = vmatprep.subr.mxu0 0.0
        %335 = vmatpush1.msra.mxu0 %v298
        %336 = vmatprep.subr.mxu0 0.0
        %337 = vmatpush1.msra.mxu0 %v297
        %338 = vmatprep.subr.mxu0 0.0
        %339 = vmatpush1.msra.mxu0 %v296
        %340 = vmatprep.subr.mxu0 0.0
        %341 = vmatpush1.msra.mxu0 %v295
        %342 = vmatprep.subr.mxu0 0.0
        %343 = vmatpush2.msra.mxu0 0.0
        %344 = vmatprep.subr.mxu0 0.0
        %345 = vmatpush2.msra.mxu0 0.0
        %346 = vmatprep.subr.mxu0 0.0
        %347 = vmatpush2.msra.mxu0 0.0
        %348 = vmatprep.subr.mxu0 0.0
        %349 = vmatpush2.msra.mxu0 0.0
        %350 = vmatprep.subr.mxu0 0.0
        %351 = vmatpush2.msra.mxu0 0.0
        %352 = vmatprep.subr.mxu0 0.0
        %353 = vmatpush2.msra.mxu0 0.0
        %354 = vmatprep.subr.mxu0 0.0
        %355 = vmatpush2.msra.mxu0 0.0
        %356 = vmatprep.subr.mxu0 0.0
        %357 = vmatpush2.msra.mxu0 0.0
        %358 = vmatprep.subr.mxu0 0.0
        %359 = vmatpush2.msra.mxu0 0.0
        %360 = vmatprep.subr.mxu0 0.0
        %361 = vmatpush2.msra.mxu0 0.0
        %362 = vmatprep.subr.mxu0 0.0
        %363 = vmatpush2.msra.mxu0 0.0
        %364 = vmatprep.subr.mxu0 0.0
        %365 = vmatpush2.msra.mxu0 0.0
        %366 = vmatprep.subr.mxu0 0.0
        %367 = vmatpush2.msra.mxu0 0.0
        %368 = vmatprep.subr.mxu0 0.0
        %369 = vmatpush2.msra.mxu0 0.0
        %370 = vmatprep.subr.mxu0 0.0
        %371 = vmatpush2.msra.mxu0 0.0
        %372 = vmatprep.subr.mxu0 0.0
        %373 = vmatpush2.msra.mxu0 0.0
        %374 = vmatprep.mubr.f32.mxu0 0.0
        %375 = vmatmul.mubr.f32.gmra.mxu0 %v308
        %v376 = vpop.f32.mrf.mxu0
        %v377 = vadd.f32 %v304, %v376
        %v378 = vpop.f32.mrf.mxu0
        %379 = vdwg.mxu0
        %v380 = vmul.f32 %v377, 0.35355338
        %vm381 = vcmask 64512
        %382 = vst.msk [vmem:[%s279] sm:$0xff] %vm381, %v380
        %384 = vrot.lane.b32.xlu0 %v377, 96
        %v385 = vpop.permute.xlu0 %384
        %387 = vst.msk [vmem:[%s286] sm:$0xff] %vm381, %v385
        %388 = vrot.lane.b32.xlu0 %v377, 64
        %v389 = vpop.permute.xlu0 %388
        %391 = vst.msk [vmem:[%s293] sm:$0xff] %vm381, %v389
        %393 = vrot.lane.b32.xlu0 %v380, 120
        %v394 = vpop.permute.xlu0 %393
        %s396 = scalar_lea.vmem %s279, 8 [#allocation7]
        %397 = vst.msk [vmem:[%s396] sm:$0xff] %vm381, %v394
        %398 = vrot.lane.b32.xlu0 %v377, 88
        %v399 = vpop.permute.xlu0 %398
        %s401 = scalar_lea.vmem %s286, 8 [#allocation8]
        %402 = vst.msk [vmem:[%s401] sm:$0xff] %vm381, %v399
        %403 = vrot.lane.b32.xlu0 %v377, 56
        %v404 = vpop.permute.xlu0 %403
        %s406 = scalar_lea.vmem %s293, 8 [#allocation10]
        %407 = vst.msk [vmem:[%s406] sm:$0xff] %vm381, %v404
        %408 = vrot.lane.b32.xlu0 %v380, 112
        %v409 = vpop.permute.xlu0 %408
        %s411 = scalar_lea.vmem %s279, 16 [#allocation7]
        %412 = vst.msk [vmem:[%s411] sm:$0xff] %vm381, %v409
        %413 = vrot.lane.b32.xlu0 %v377, 80
        %v414 = vpop.permute.xlu0 %413
        %s416 = scalar_lea.vmem %s286, 16 [#allocation8]
        %417 = vst.msk [vmem:[%s416] sm:$0xff] %vm381, %v414
        %418 = vrot.lane.b32.xlu0 %v377, 48
        %v419 = vpop.permute.xlu0 %418
        %s421 = scalar_lea.vmem %s293, 16 [#allocation10]
        %422 = vst.msk [vmem:[%s421] sm:$0xff] %vm381, %v419
        %423 = vrot.lane.b32.xlu0 %v380, 104
        %v424 = vpop.permute.xlu0 %423
        %s426 = scalar_lea.vmem %s279, 24 [#allocation7]
        %427 = vst.msk [vmem:[%s426] sm:$0xff] %vm381, %v424
        %428 = vrot.lane.b32.xlu0 %v377, 72
        %v429 = vpop.permute.xlu0 %428
        %s431 = scalar_lea.vmem %s286, 24 [#allocation8]
        %432 = vst.msk [vmem:[%s431] sm:$0xff] %vm381, %v429
        %433 = vrot.lane.b32.xlu0 %v377, 40
        %v434 = vpop.permute.xlu0 %433
        %s436 = scalar_lea.vmem %s293, 24 [#allocation10]
        %437 = vst.msk [vmem:[%s436] sm:$0xff] %vm381, %v434
        %s438 = sand.u32 %s119, 1
        %s439 = scalar_lea.sflag [#allocation4], %s438
        %s440 = sand.u32 %s119, 1
        %s441 = smul.addr %s440, 32
        %s442 = scalar_lea.vmem [#allocation7], %s441
        %s443 = sand.u32 %s27, 1
        %s444 = scalar_lea.sflag [#allocation9], %s443
        %s445 = sand.u32 %s147, 1
        %s446 = smul.addr %s445, 32
        %s447 = scalar_lea.vmem [#allocation8], %s446
        %s448 = sand.u32 %s27, 1
        %s449 = scalar_lea.sflag [#allocation9], %s448
        %s450 = sand.u32 %s175, 1
        %s451 = smul.addr %s450, 32
        %s452 = scalar_lea.vmem [#allocation10], %s451
        // Predicated region
        $region41: #{tpu_custom_call.1} parent=31 // pred_check
          %p453 = pneg %p129
        $region42: #{tpu_custom_call.1} parent=31 // pred_check_branch
          %455 = sbr.rel (%p453) target = $region44
        $region43: #{tpu_custom_call.1} parent=31 // pred_region
          %s457 = ssub.s32 512, 512
          %458 = vsyncadd %s439, %s457
          %s459 = smul.addr %s31, 4
          %s460 = sadd.s32 %s32, %s459
          %s461 = smul.addr %s460, 128
          %s462 = scalar_lea.hbm %s3, %s461
          %s463 = sshll.u32 %s442, 4
          %s464 = int_to_ptr.vmem [resolvable:$true] %s463
          %469 = dma.vmem_to_hbm [thread:$0]  %s464, 512, %s462, %s439, 128, 128, 8
        $region44: #{tpu_custom_call.1} parent=31 // pred_fallthru
          _
        // Predicated region
        $region45: #{tpu_custom_call.1} parent=31 // pred_check
          %p470 = pneg %p157
        $region46: #{tpu_custom_call.1} parent=31 // pred_check_branch
          %472 = sbr.rel (%p470) target = $region48
        $region47: #{tpu_custom_call.1} parent=31 // pred_region
          %s474 = ssub.s32 512, 512
          %475 = vsyncadd %s444, %s474
          %s476 = smul.addr %s31, 4
          %s477 = sadd.s32 %s32, %s476
          %s478 = smul.addr %s477, 128
          %s479 = scalar_lea.hbm %s4, %s478
          %s480 = sshll.u32 %s447, 4
          %s481 = int_to_ptr.vmem [resolvable:$true] %s480
          %486 = dma.vmem_to_hbm [thread:$0]  %s481, 512, %s479, %s444, 128, 128, 8
        $region48: #{tpu_custom_call.1} parent=31 // pred_fallthru
          _
        // Predicated region
        $region49: #{tpu_custom_call.1} parent=31 // pred_check
          %p487 = pneg %p185
        $region50: #{tpu_custom_call.1} parent=31 // pred_check_branch
          %489 = sbr.rel (%p487) target = $region52
        $region51: #{tpu_custom_call.1} parent=31 // pred_region
          %s491 = ssub.s32 512, 512
          %492 = vsyncadd %s449, %s491
          %s493 = smul.addr %s31, 4
          %s494 = sadd.s32 %s32, %s493
          %s495 = smul.addr %s494, 128
          %s496 = scalar_lea.hbm %s5, %s495
          %s497 = sshll.u32 %s452, 4
          %s498 = int_to_ptr.vmem [resolvable:$true] %s497
          %503 = dma.vmem_to_hbm [thread:$0]  %s498, 512, %s496, %s449, 128, 128, 8
        $region52: #{tpu_custom_call.1} parent=31 // pred_fallthru
          _
      $region32: #{tpu_custom_call.1} parent=5 // pred_fallthru
        _
      %p504 = scmp.le.s32.totalorder 2, %s22
      // Predicated region
      $region53: #{tpu_custom_call.1} parent=5 // pred_check
        %p505 = pneg %p504
      $region54: #{tpu_custom_call.1} parent=5 // pred_check_branch
        %507 = sbr.rel (%p505) target = $region56
      $region55: #{tpu_custom_call.1} parent=5 // pred_region
        %s508 = ssub.s32 %s22, 2
        // Predicated region
        $region57: #{tpu_custom_call.1} parent=55 // pred_check
          %p509 = pneg %p135
        $region58: #{tpu_custom_call.1} parent=55 // pred_check_branch
          %511 = sbr.rel (%p509) target = $region60
        $region59: #{tpu_custom_call.1} parent=55 // pred_region
          %s512 = sand.u32 %s120, 1
          %s513 = scalar_lea.sflag [#allocation4], %s512
          %s514 = sand.u32 %s120, 1
          %s515 = smul.addr %s514, 32
          %s516 = scalar_lea.vmem [#allocation7], %s515
          %517 = dma.done %s513, 512
        $region60: #{tpu_custom_call.1} parent=55 // pred_fallthru
          _
        // Predicated region
        $region61: #{tpu_custom_call.1} parent=55 // pred_check
          %p518 = pneg %p163
        $region62: #{tpu_custom_call.1} parent=55 // pred_check_branch
          %520 = sbr.rel (%p518) target = $region64
        $region63: #{tpu_custom_call.1} parent=55 // pred_region
          %s521 = sand.u32 %s28, 1
          %s522 = scalar_lea.sflag [#allocation9], %s521
          %s523 = sand.u32 %s148, 1
          %s524 = smul.addr %s523, 32
          %s525 = scalar_lea.vmem [#allocation8], %s524
          %526 = dma.done %s522, 512
        $region64: #{tpu_custom_call.1} parent=55 // pred_fallthru
          _
        // Predicated region
        $region65: #{tpu_custom_call.1} parent=55 // pred_check
          %p527 = pneg %p191
        $region66: #{tpu_custom_call.1} parent=55 // pred_check_branch
          %529 = sbr.rel (%p527) target = $region68
        $region67: #{tpu_custom_call.1} parent=55 // pred_region
          %s530 = sand.u32 %s28, 1
          %s531 = scalar_lea.sflag [#allocation9], %s530
          %s532 = sand.u32 %s176, 1
          %s533 = smul.addr %s532, 32
          %s534 = scalar_lea.vmem [#allocation10], %s533
          %535 = dma.done %s531, 512
        $region68: #{tpu_custom_call.1} parent=55 // pred_fallthru
          _
      $region56: #{tpu_custom_call.1} parent=5 // pred_fallthru
        _
    $region6: #{tpu_custom_call.1} parent=1 // loop_footer
      %s26 = sadd.s32 1, %s22
    $region7: #{tpu_custom_call.1} parent=1 // loop_footer_branch
      %21 = sbr.rel target = $region3
    $region8: #{tpu_custom_call.1} parent=1 // loop_exit
      _
    %536 = vsyncpa [#allocation3], 1
    %s537 = scalar_lea.sflag [#allocation3], 1
    %538 = vsyncpa %s537, 1
    %539 = vsyncpa [#allocation6], 1
    %540 = vsyncpa [#allocation4], 1
    %s541 = scalar_lea.sflag [#allocation4], 1
    %542 = vsyncpa %s541, 1
    %543 = vsyncpa [#allocation9], 1
    %s544 = scalar_lea.sflag [#allocation9], 1
    %545 = vsyncpa %s544, 1

</llo_original>
